<compile_context>
chip_gen: v7x
topology: tpu7x:2x2x1
jax: 0.10.0
libtpu: 0.0.40
codegen_flags: <defaults>
</compile_context>

<pallas_src>
import functools

import numpy as np
import jax
import jax.numpy as jnp
from jax import lax
from jax.experimental import pallas as pl
from jax.experimental.pallas import tpu as pltpu

_BN_EPS = 1e-5


# ----------------------------------------------------------------------------
# activation (the PyTorch module takes `activation` as a constructor; ReLU6 is
# what the surrounding EfficientNet-style network uses)
# ----------------------------------------------------------------------------
def _activation(v, kind):
    if kind == "relu6":
        return jnp.clip(v, 0.0, 6.0)
    if kind == "relu":
        return jnp.maximum(v, 0.0)
    raise ValueError(f"unsupported activation: {kind}")


# ----------------------------------------------------------------------------
# fused kernel: conv1(1x1)+BN+act -> depthwise k3 conv+BN+act -> conv3(1x1)
#               (+ residual when stride == 1); Dropout = identity (eval).
# ----------------------------------------------------------------------------
def bottleneck_kernel(*refs, stride, residual, act):
    if stride == 2:
        (x_ref, w1_ref, b1_ref, wd_ref, bd_ref,
         w3_ref, b3_ref, sel_ref, o_ref) = refs
    else:
        (x_ref, w1_ref, b1_ref, wd_ref, bd_ref,
         w3_ref, b3_ref, o_ref) = refs

    x = x_ref[0]                                       # (Cin, L) f32, L on lanes
    L = x.shape[1]

    # conv1 (1x1) with BN(b0) folded into (w1, b1); bf16 MXU, f32 accumulate.
    y = jnp.dot(w1_ref[...], x.astype(jnp.bfloat16),
                preferred_element_type=jnp.float32) + b1_ref[...]
    y = _activation(y, act)                            # (Cmid, L)

    # depthwise conv2 (k=3, pad=1) with BN(b1) folded into (wd, bd).
    # zero padding realized with lane rolls + edge masks (no concatenate /
    # shifted-slice temporaries).
    lane = lax.broadcasted_iota(jnp.int32, (1, L), 1)
    not_first = (lane > 0).astype(jnp.float32)         # kills wrapped col 0
    not_last = (lane < L - 1).astype(jnp.float32)      # kills wrapped col L-1
    y_lm1 = pltpu.roll(y, 1, 1) * not_first            # y[:, l-1], zero at l=0
    y_lp1 = pltpu.roll(y, L - 1, 1) * not_last         # y[:, l+1], zero at l=L-1
    acc = wd_ref[0] * y_lm1 + wd_ref[1] * y + wd_ref[2] * y_lp1 + bd_ref[...]

    if stride == 2:
        # keep only even conv centers: one small f32 matmul against a
        # precomputed 0/1 selector (pass-through values stay exact-ish).
        acc = jnp.dot(acc, sel_ref[...], preferred_element_type=jnp.float32)

    z = _activation(acc, act)                          # (Cmid, L_out)

    # conv3 (1x1); Dropout is identity in eval mode.
    out = jnp.dot(w3_ref[...], z.astype(jnp.bfloat16),
                  preferred_element_type=jnp.float32) + b3_ref[...]
    if residual:
        out = out + x                                  # stride==1 skip connection
    o_ref[0] = out.astype(o_ref.dtype)


# ----------------------------------------------------------------------------
# deterministic PyTorch-like parameters (unfolded) + host-side folding
# ----------------------------------------------------------------------------
def _uconv(key, shape, fan_in):
    bound = 1.0 / float(np.sqrt(fan_in))
    return jax.random.uniform(key, shape, jnp.float32, -bound, bound)


def _bn_stats(key, c):
    ks = jax.random.split(key, 4)
    gamma = 1.0 + 0.05 * jax.random.normal(ks[0], (c,), jnp.float32)
    beta = 0.05 * jax.random.normal(ks[1], (c,), jnp.float32)
    mean = 0.05 * jax.random.normal(ks[2], (c,), jnp.float32)
    var = 1.0 + 0.05 * jax.random.uniform(ks[3], (c,), jnp.float32)
    return gamma, beta, mean, var


def make_bottleneck_params(key, cin, cout, expansion):
    cmid = cin * expansion
    ks = jax.random.split(key, 8)
    return {
        "w1": _uconv(ks[0], (cmid, cin), cin),       # Conv1d(cin, cmid, k=1)
        "b1": _uconv(ks[1], (cmid,), cin),
        "wd": _uconv(ks[2], (cmid, 3), 3),           # depthwise Conv1d, k=3
        "bd": _uconv(ks[3], (cmid,), 3),
        "w3": _uconv(ks[4], (cout, cmid), cmid),     # Conv1d(cmid, cout, k=1)
        "b3": _uconv(ks[5], (cout,), cmid),
        "bn0": _bn_stats(ks[6], cmid),
        "bn1": _bn_stats(ks[7], cmid),
    }


def _fold_params(p):
    """Fold eval-mode BN affines and conv biases into the conv weights."""
    g0, be0, m0, v0 = p["bn0"]
    s0 = g0 * lax.rsqrt(v0 + _BN_EPS)
    t0 = be0 - m0 * s0
    g1, be1, m1, v1 = p["bn1"]
    s1 = g1 * lax.rsqrt(v1 + _BN_EPS)
    t1 = be1 - m1 * s1

    cmid = p["w1"].shape[0]
    cout = p["w3"].shape[0]
    w1f = (p["w1"] * s0[:, None]).astype(jnp.bfloat16)              # (Cmid, Cin)
    b1f = (p["b1"] * s0 + t0).reshape(cmid, 1)                      # f32
    wdf = jnp.transpose(p["wd"] * s1[:, None]).reshape(3, cmid, 1)  # f32 per tap
    bdf = (p["bd"] * s1 + t1).reshape(cmid, 1)                      # f32
    w3f = p["w3"].astype(jnp.bfloat16)                              # (Cout, Cmid)
    b3f = p["b3"].reshape(cout, 1)                                  # f32
    return [w1f, b1f, wdf, bdf, w3f, b3f]


def _stride2_selector(l_in, l_out):
    sel = np.zeros((l_in, l_out), np.float32)
    sel[2 * np.arange(l_out), np.arange(l_out)] = 1.0
    return jnp.asarray(sel)


def _full_spec(arr):
    nd = arr.ndim
    return pl.BlockSpec(arr.shape, lambda b, _nd=nd: (0,) * _nd)


# ----------------------------------------------------------------------------
# wrapper: one pallas_call per Bottleneck, grid over batch (parallel)
# ----------------------------------------------------------------------------
@functools.partial(jax.jit, static_argnames=("stride", "act"))
def bottleneck_forward(x, params, *, stride=1, act="relu6"):
    assert stride in (1, 2)
    bsz, cin, L = x.shape
    cout = params["w3"].shape[0]
    residual = stride == 1
    if residual and cout != cin:
        raise ValueError("stride=1 residual path requires in_channel == out_channel")

    folded = _fold_params(params)
    if stride == 2:
        l_out = (L + 2 - 3) // 2 + 1
        folded.append(_stride2_selector(L, l_out))
    else:
        l_out = L

    kern = functools.partial(bottleneck_kernel, stride=stride,
                             residual=residual, act=act)
    in_specs = [pl.BlockSpec((1, cin, L), lambda b: (b, 0, 0))]
    in_specs += [_full_spec(q) for q in folded]
    return pl.pallas_call(
        kern,
        out_shape=jax.ShapeDtypeStruct((bsz, cout, l_out), jnp.float32),
        grid=(bsz,),
        in_specs=in_specs,
        out_specs=pl.BlockSpec((1, cout, l_out), lambda b: (b, 0, 0)),
        compiler_params=pltpu.CompilerParams(
            dimension_semantics=("parallel",)),      # batch across cores on v7x
    )(x, *folded)


# ----------------------------------------------------------------------------
# pure-JAX eval-mode reference (matches the PyTorch module)
# ----------------------------------------------------------------------------
def bottleneck_ref(x, p, *, stride=1, act="relu6"):
    def bn(y, stats):
        g, b, m, v = stats
        s = g * lax.rsqrt(v + _BN_EPS)
        return y * s[None, :, None] + (b - m * s)[None, :, None]

    y = jnp.einsum("oc,bcl->bol", p["w1"], x) + p["b1"][None, :, None]
    y = _activation(bn(y, p["bn0"]), act)
    yp = jnp.pad(y, ((0, 0), (0, 0), (1, 1)))
    L = x.shape[2]
    acc = sum(p["wd"][None, :, k, None] * yp[:, :, k:k + L] for k in range(3))
    acc = acc + p["bd"][None, :, None]
    if stride == 2:
        acc = acc[:, :, ::2]
    z = _activation(bn(acc, p["bn1"]), act)
    out = jnp.einsum("oc,bcl->bol", p["w3"], z) + p["b3"][None, :, None]
    if stride == 1:
        out = out + x                                # Dropout = identity (eval)
    return out


# ----------------------------------------------------------------------------
if __name__ == "__main__":
    key = jax.random.PRNGKey(0)
    kp1, kp2, kx1, kx2 = jax.random.split(key, 4)

    # stride=1 residual block: 16 -> (96) -> 16, L=128 (lane axis fully dense).
    p1 = make_bottleneck_params(kp1, cin=16, cout=16, expansion=6)
    x1 = jax.random.normal(kx1, (2, 16, 128), jnp.float32)
    y1 = jax.block_until_ready(bottleneck_forward(x1, p1, stride=1))
    assert y1.shape == (2, 16, 128), y1.shape
    assert bool(jnp.all(jnp.isfinite(y1)))
    r1 = bottleneck_ref(x1, p1, stride=1)
    err1 = float(jnp.max(jnp.abs(y1 - r1)))
    rel1 = float(jnp.linalg.norm(y1 - r1) / jnp.linalg.norm(r1))
    assert err1 < 0.25 and rel1 < 0.05, (err1, rel1)   # bf16-matmul tolerance

    # stride=2 downsampling block: 16 -> (96) -> 24, L 256 -> 128
    # (output lane dim stays at 128: no masked partial stores).
    p2 = make_bottleneck_params(kp2, cin=16, cout=24, expansion=6)
    x2 = jax.random.normal(kx2, (2, 16, 256), jnp.float32)
    y2 = jax.block_until_ready(bottleneck_forward(x2, p2, stride=2))
    assert y2.shape == (2, 24, 128), y2.shape
    assert bool(jnp.all(jnp.isfinite(y2)))
    r2 = bottleneck_ref(x2, p2, stride=2)
    err2 = float(jnp.max(jnp.abs(y2 - r2)))
    rel2 = float(jnp.linalg.norm(y2 - r2) / jnp.linalg.norm(r2))
    assert err2 < 0.25 and rel2 < 0.05, (err2, rel2)

    print("KERNEL_OK")
</pallas_src>

<mosaic_0001>
module attributes {stable_mosaic.version = 11 : i64} {
  func.func @bottleneck_kernel(%arg0: i32, %arg1: memref<1x16x128xf32, #tpu.memory_space<vmem>>, %arg2: memref<96x16xbf16, #tpu.memory_space<vmem>>, %arg3: memref<96x1xf32, #tpu.memory_space<vmem>>, %arg4: memref<3x96x1xf32, #tpu.memory_space<vmem>>, %arg5: memref<96x1xf32, #tpu.memory_space<vmem>>, %arg6: memref<16x96xbf16, #tpu.memory_space<vmem>>, %arg7: memref<16x1xf32, #tpu.memory_space<vmem>>, %arg8: memref<1x16x128xf32, #tpu.memory_space<vmem>>) attributes {dimension_semantics = [#tpu.dimension_semantics<parallel>], iteration_bounds = array<i64: 2>, scalar_prefetch = 0 : i64, scratch_operands = 0 : i64, tpu.core_type = #tpu.core_type<tc>, window_params = [{transform_indices = @transform_0, window_bounds = array<i64: 1, 16, 128>}, {pipeline_mode = #tpu.pipeline_mode<synchronous>, transform_indices = @transform_1, window_bounds = array<i64: 96, 16>}, {pipeline_mode = #tpu.pipeline_mode<synchronous>, transform_indices = @transform_2, window_bounds = array<i64: 96, 1>}, {pipeline_mode = #tpu.pipeline_mode<synchronous>, transform_indices = @transform_3, window_bounds = array<i64: 3, 96, 1>}, {pipeline_mode = #tpu.pipeline_mode<synchronous>, transform_indices = @transform_4, window_bounds = array<i64: 96, 1>}, {pipeline_mode = #tpu.pipeline_mode<synchronous>, transform_indices = @transform_5, window_bounds = array<i64: 16, 96>}, {pipeline_mode = #tpu.pipeline_mode<synchronous>, transform_indices = @transform_6, window_bounds = array<i64: 16, 1>}, {transform_indices = @transform_7, window_bounds = array<i64: 1, 16, 128>}]} {
    %c0 = arith.constant 0 : index
    %c0_0 = arith.constant 0 : index
    %c0_1 = arith.constant 0 : index
    %0 = vector.load %arg1[%c0, %c0_0, %c0_1] : memref<1x16x128xf32, #tpu.memory_space<vmem>>, vector<1x16x128xf32>
    %1 = vector.shape_cast %0 : vector<1x16x128xf32> to vector<16x128xf32>
    %c0_2 = arith.constant 0 : index
    %c0_3 = arith.constant 0 : index
    %2 = vector.load %arg2[%c0_2, %c0_3] : memref<96x16xbf16, #tpu.memory_space<vmem>>, vector<96x16xbf16>
    %3 = arith.truncf %1 : vector<16x128xf32> to vector<16x128xbf16>
    %cst = arith.constant dense<0.000000e+00> : vector<96x128xf32>
    %4 = tpu.matmul %2, %3, %cst {dimension_numbers = #tpu.dot_dimension_numbers<[1], [0], [0], [1], [0, 0, 1, 1], [], []>} : vector<96x16xbf16>, vector<16x128xbf16>, vector<96x128xf32> -> vector<96x128xf32>
    %c0_4 = arith.constant 0 : index
    %c0_5 = arith.constant 0 : index
    %5 = vector.load %arg3[%c0_4, %c0_5] : memref<96x1xf32, #tpu.memory_space<vmem>>, vector<96x1xf32>
    %6 = vector.broadcast %5 : vector<96x1xf32> to vector<96x128xf32>
    %7 = arith.addf %4, %6 : vector<96x128xf32>
    %cst_6 = arith.constant 0.000000e+00 : f32
    %cst_7 = arith.constant 6.000000e+00 : f32
    %8 = vector.broadcast %cst_6 : f32 to vector<96x128xf32>
    %9 = arith.maximumf %8, %7 : vector<96x128xf32>
    %10 = vector.broadcast %cst_7 : f32 to vector<96x128xf32>
    %11 = arith.minimumf %10, %9 : vector<96x128xf32>
    %12 = tpu.iota {dimensions = array<i32: 1>} : vector<1x128xi32>
    %c0_i32 = arith.constant 0 : i32
    %13 = vector.broadcast %c0_i32 : i32 to vector<1x128xi32>
    %14 = arith.cmpi sgt, %12, %13 : vector<1x128xi32>
    %15 = arith.extui %14 : vector<1x128xi1> to vector<1x128xi32>
    %16 = arith.sitofp %15 : vector<1x128xi32> to vector<1x128xf32>
    %c127_i32 = arith.constant 127 : i32
    %17 = vector.broadcast %c127_i32 : i32 to vector<1x128xi32>
    %18 = arith.cmpi slt, %12, %17 : vector<1x128xi32>
    %19 = arith.extui %18 : vector<1x128xi1> to vector<1x128xi32>
    %20 = arith.sitofp %19 : vector<1x128xi32> to vector<1x128xf32>
    %c1_i32 = arith.constant 1 : i32
    %21 = tpu.dynamic_rotate %11 by %c1_i32 dim 1 : vector<96x128xf32>, i32 -> vector<96x128xf32>
    %22 = vector.broadcast %16 : vector<1x128xf32> to vector<96x128xf32>
    %23 = arith.mulf %21, %22 : vector<96x128xf32>
    %c127_i32_8 = arith.constant 127 : i32
    %24 = tpu.dynamic_rotate %11 by %c127_i32_8 dim 1 : vector<96x128xf32>, i32 -> vector<96x128xf32>
    %25 = vector.broadcast %20 : vector<1x128xf32> to vector<96x128xf32>
    %26 = arith.mulf %24, %25 : vector<96x128xf32>
    %c0_9 = arith.constant 0 : index
    %c0_10 = arith.constant 0 : index
    %c0_11 = arith.constant 0 : index
    %27 = vector.load %arg4[%c0_9, %c0_10, %c0_11] : memref<3x96x1xf32, #tpu.memory_space<vmem>>, vector<1x96x1xf32>
    %28 = vector.shape_cast %27 : vector<1x96x1xf32> to vector<96x1xf32>
    %29 = vector.broadcast %28 : vector<96x1xf32> to vector<96x128xf32>
    %30 = arith.mulf %29, %23 : vector<96x128xf32>
    %c1 = arith.constant 1 : index
    %c0_12 = arith.constant 0 : index
    %c0_13 = arith.constant 0 : index
    %31 = vector.load %arg4[%c1, %c0_12, %c0_13] : memref<3x96x1xf32, #tpu.memory_space<vmem>>, vector<1x96x1xf32>
    %32 = vector.shape_cast %31 : vector<1x96x1xf32> to vector<96x1xf32>
    %33 = vector.broadcast %32 : vector<96x1xf32> to vector<96x128xf32>
    %34 = arith.mulf %33, %11 : vector<96x128xf32>
    %35 = arith.addf %30, %34 : vector<96x128xf32>
    %c2 = arith.constant 2 : index
    %c0_14 = arith.constant 0 : index
    %c0_15 = arith.constant 0 : index
    %36 = vector.load %arg4[%c2, %c0_14, %c0_15] : memref<3x96x1xf32, #tpu.memory_space<vmem>>, vector<1x96x1xf32>
    %37 = vector.shape_cast %36 : vector<1x96x1xf32> to vector<96x1xf32>
    %38 = vector.broadcast %37 : vector<96x1xf32> to vector<96x128xf32>
    %39 = arith.mulf %38, %26 : vector<96x128xf32>
    %40 = arith.addf %35, %39 : vector<96x128xf32>
    %c0_16 = arith.constant 0 : index
    %c0_17 = arith.constant 0 : index
    %41 = vector.load %arg5[%c0_16, %c0_17] : memref<96x1xf32, #tpu.memory_space<vmem>>, vector<96x1xf32>
    %42 = vector.broadcast %41 : vector<96x1xf32> to vector<96x128xf32>
    %43 = arith.addf %40, %42 : vector<96x128xf32>
    %cst_18 = arith.constant 0.000000e+00 : f32
    %cst_19 = arith.constant 6.000000e+00 : f32
    %44 = vector.broadcast %cst_18 : f32 to vector<96x128xf32>
    %45 = arith.maximumf %44, %43 : vector<96x128xf32>
    %46 = vector.broadcast %cst_19 : f32 to vector<96x128xf32>
    %47 = arith.minimumf %46, %45 : vector<96x128xf32>
    %c0_20 = arith.constant 0 : index
    %c0_21 = arith.constant 0 : index
    %48 = vector.load %arg6[%c0_20, %c0_21] : memref<16x96xbf16, #tpu.memory_space<vmem>>, vector<16x96xbf16>
    %49 = arith.truncf %47 : vector<96x128xf32> to vector<96x128xbf16>
    %cst_22 = arith.constant dense<0.000000e+00> : vector<16x128xf32>
    %50 = tpu.matmul %48, %49, %cst_22 {dimension_numbers = #tpu.dot_dimension_numbers<[1], [0], [0], [1], [0, 0, 1, 1], [], []>} : vector<16x96xbf16>, vector<96x128xbf16>, vector<16x128xf32> -> vector<16x128xf32>
    %c0_23 = arith.constant 0 : index
    %c0_24 = arith.constant 0 : index
    %51 = vector.load %arg7[%c0_23, %c0_24] : memref<16x1xf32, #tpu.memory_space<vmem>>, vector<16x1xf32>
    %52 = vector.broadcast %51 : vector<16x1xf32> to vector<16x128xf32>
    %53 = arith.addf %50, %52 : vector<16x128xf32>
    %54 = arith.addf %53, %1 : vector<16x128xf32>
    %c0_25 = arith.constant 0 : index
    %c0_26 = arith.constant 0 : index
    %c0_27 = arith.constant 0 : index
    %55 = vector.load %arg8[%c0_25, %c0_26, %c0_27] : memref<1x16x128xf32, #tpu.memory_space<vmem>>, vector<1x16x128xf32>
    %56 = vector.shape_cast %55 : vector<1x16x128xf32> to vector<16x128xf32>
    %57 = vector.shape_cast %54 : vector<16x128xf32> to vector<1x16x128xf32>
    tpu.vector_store %arg8[%c0_25, %c0_26, %c0_27], %57 {strides = array<i32>} : memref<1x16x128xf32, #tpu.memory_space<vmem>>, vector<1x16x128xf32>,
    return
  }
  func.func @transform_0(%arg0: i32) -> (i32, i32, i32) {
    %c0_i32 = arith.constant 0 : i32
    %c0_i32_0 = arith.constant 0 : i32
    %c0_i32_1 = arith.constant 0 : i32
    return %arg0, %c0_i32, %c0_i32_0 : i32, i32, i32
  }
  func.func @transform_1(%arg0: i32) -> (i32, i32) {
    %c0_i32 = arith.constant 0 : i32
    %c0_i32_0 = arith.constant 0 : i32
    %c0_i32_1 = arith.constant 0 : i32
    return %c0_i32, %c0_i32_0 : i32, i32
  }
  func.func @transform_2(%arg0: i32) -> (i32, i32) {
    %c0_i32 = arith.constant 0 : i32
    %c0_i32_0 = arith.constant 0 : i32
    %c0_i32_1 = arith.constant 0 : i32
    return %c0_i32, %c0_i32_0 : i32, i32
  }
  func.func @transform_3(%arg0: i32) -> (i32, i32, i32) {
    %c0_i32 = arith.constant 0 : i32
    %c0_i32_0 = arith.constant 0 : i32
    %c0_i32_1 = arith.constant 0 : i32
    %c0_i32_2 = arith.constant 0 : i32
    return %c0_i32, %c0_i32_0, %c0_i32_1 : i32, i32, i32
  }
  func.func @transform_4(%arg0: i32) -> (i32, i32) {
    %c0_i32 = arith.constant 0 : i32
    %c0_i32_0 = arith.constant 0 : i32
    %c0_i32_1 = arith.constant 0 : i32
    return %c0_i32, %c0_i32_0 : i32, i32
  }
  func.func @transform_5(%arg0: i32) -> (i32, i32) {
    %c0_i32 = arith.constant 0 : i32
    %c0_i32_0 = arith.constant 0 : i32
    %c0_i32_1 = arith.constant 0 : i32
    return %c0_i32, %c0_i32_0 : i32, i32
  }
  func.func @transform_6(%arg0: i32) -> (i32, i32) {
    %c0_i32 = arith.constant 0 : i32
    %c0_i32_0 = arith.constant 0 : i32
    %c0_i32_1 = arith.constant 0 : i32
    return %c0_i32, %c0_i32_0 : i32, i32
  }
  func.func @transform_7(%arg0: i32) -> (i32, i32, i32) {
    %c0_i32 = arith.constant 0 : i32
    %c0_i32_0 = arith.constant 0 : i32
    %c0_i32_1 = arith.constant 0 : i32
    return %arg0, %c0_i32, %c0_i32_0 : i32, i32, i32
  }
}

</mosaic_0001>

<llo_original>
// kernel: bottleneck_forward.1
$region0: #{bottleneck_forward.1}
  #allocation0 [shape = 'u32[]', space=smem, size = 0x4, offset = 0x4, fixed_abs, tag = 'smem constant byte address 0x4 - core index']
  #allocation1 [shape = 'u32[144,128]{1,0:T(1,128)}', space=vmem, size = 0x12000, scoped, tag = 'internal scratch']
  %s0 = inlined_call_operand.vmem [shape: f32[2,16,128], index: 0, kind: input, shape index: {}]
  %s1 = inlined_call_operand.vmem [shape: bf16[96,16], index: 1, kind: input, shape index: {}]
  %s2 = inlined_call_operand.vmem [shape: f32[96,1], index: 2, kind: input, shape index: {}]
  %s3 = inlined_call_operand.vmem [shape: f32[3,96,1], index: 3, kind: input, shape index: {}]
  %s4 = inlined_call_operand.vmem [shape: f32[96,1], index: 4, kind: input, shape index: {}]
  %s5 = inlined_call_operand.vmem [shape: bf16[16,96], index: 5, kind: input, shape index: {}]
  %s6 = inlined_call_operand.vmem [shape: f32[16,1], index: 6, kind: input, shape index: {}]
  %s7 = inlined_call_operand.hbm [shape: f32[2,16,128], index: 7, kind: output, shape index: {}]
  %s8 = sld [smem:[#allocation0]]
  $region61: #{bottleneck_forward.1} parent=0
    _
  %s10 = ssub.s32 1, %s8
  %s11 = scalar_select 0, %s10, %s8
  $region1: #{bottleneck_forward.1} parent=0
    #allocation2 [shape = 'u8[16384]{0}', space=vmem, size = 0x4000, scoped, tag = 'output window, operand 0']
    #allocation3 [shape = 's32[2]{0}', space=sflag, size = 0x8, scoped, tag = 'scoped memory for bottleneck_forward.1']
    %12 = vsyncpa [#allocation3], 0
    %s13 = scalar_lea.sflag [#allocation3], 1
    %14 = vsyncpa %s13, 0
    loop: start=0, step=1, limit=4
    $region2: #{bottleneck_forward.1} parent=1 // loop_pre_header
      _
    $region3: #{bottleneck_forward.1} parent=1 // loop_header
      %s16 = sphi 0, %s20
      %p17 = scmp.ge.s32.totalorder %s16, 4
      %s26 = sphi 0, %s28
      %s29 = sphi 0, %s26
      %s30 = sphi 0, %s29
      %s46 = sphi 0, %s30
      %s50 = sphi 0, %s50
      %s52 = sphi 0, %s50
      %s53 = sphi 0, %s52
      %s67 = sphi 0, %s53
      %s71 = sphi 0, %s71
      %s73 = sphi 0, %s71
      %s74 = sphi 0, %s73
      %s88 = sphi 0, %s74
      %s92 = sphi 0, %s92
      %s94 = sphi 0, %s92
      %s95 = sphi 0, %s94
      %s109 = sphi 0, %s95
      %s113 = sphi 0, %s113
      %s115 = sphi 0, %s113
      %s116 = sphi 0, %s115
      %s130 = sphi 0, %s116
      %s134 = sphi 0, %s134
      %s136 = sphi 0, %s134
      %s137 = sphi 0, %s136
      %s151 = sphi 0, %s137
      %s155 = sphi 0, %s155
      %s157 = sphi 0, %s155
      %s158 = sphi 0, %s157
      %s172 = sphi 0, %s158
      %s178 = sphi 0, %s180
      %s181 = sphi 0, %s178
      %s182 = sphi 0, %s181
      %s198 = sphi 0, %s182
    $region4: #{bottleneck_forward.1} parent=1 // loop_header_branch
      %19 = sbr.rel (%p17) target = $region8
    $region5: #{bottleneck_forward.1} parent=1 // loop_body
      %s21 = ssub.s32 %s16, 1
      %s22 = ssub.s32 %s16, 2
      %s23 = sadd.s32 %s16, 1
      %s24 = ssub.s32 %s16, %s23
      %p25 = scmp.eq.s32.totalorder %s24, 0
      %s27 = sadd.s32 %s26, 1
      %s28 = scalar_select %p25, %s26, %s27
      %p31 = pneg %p25
      %p32 = scmp.eq.s32.totalorder %s16, 1
      %p33 = por %p31, %p32
      %p34 = scmp.ne.s32.totalorder %s26, %s29
      %p35 = scmp.eq.s32.totalorder %s16, 0
      %p36 = por %p34, %p35
      %p37 = scmp.ne.s32.totalorder %s26, %s29
      %p38 = scmp.eq.s32.totalorder %s21, 1
      %p39 = por %p37, %p38
      %p40 = scmp.ne.s32.totalorder %s29, %s30
      %p41 = scmp.eq.s32.totalorder %s21, 0
      %p42 = por %p40, %p41
      %p43 = scmp.ne.s32.totalorder %s29, %s30
      %p44 = scmp.eq.s32.totalorder %s22, 1
      %p45 = por %p43, %p44
      %p47 = scmp.ne.s32.totalorder %s30, %s46
      %p48 = scmp.eq.s32.totalorder %s22, 0
      %p49 = por %p47, %p48
      %s51 = sadd.s32 %s50, 1
      %p54 = scmp.eq.s32.totalorder %s16, 1
      %p55 = scmp.ne.s32.totalorder %s50, %s52
      %p56 = scmp.eq.s32.totalorder %s16, 0
      %p57 = por %p55, %p56
      %p58 = scmp.ne.s32.totalorder %s50, %s52
      %p59 = scmp.eq.s32.totalorder %s21, 1
      %p60 = por %p58, %p59
      %p61 = scmp.ne.s32.totalorder %s52, %s53
      %p62 = scmp.eq.s32.totalorder %s21, 0
      %p63 = por %p61, %p62
      %p64 = scmp.ne.s32.totalorder %s52, %s53
      %p65 = scmp.eq.s32.totalorder %s22, 1
      %p66 = por %p64, %p65
      %p68 = scmp.ne.s32.totalorder %s53, %s67
      %p69 = scmp.eq.s32.totalorder %s22, 0
      %p70 = por %p68, %p69
      %s72 = sadd.s32 %s71, 1
      %p75 = scmp.eq.s32.totalorder %s16, 1
      %p76 = scmp.ne.s32.totalorder %s71, %s73
      %p77 = scmp.eq.s32.totalorder %s16, 0
      %p78 = por %p76, %p77
      %p79 = scmp.ne.s32.totalorder %s71, %s73
      %p80 = scmp.eq.s32.totalorder %s21, 1
      %p81 = por %p79, %p80
      %p82 = scmp.ne.s32.totalorder %s73, %s74
      %p83 = scmp.eq.s32.totalorder %s21, 0
      %p84 = por %p82, %p83
      %p85 = scmp.ne.s32.totalorder %s73, %s74
      %p86 = scmp.eq.s32.totalorder %s22, 1
      %p87 = por %p85, %p86
      %p89 = scmp.ne.s32.totalorder %s74, %s88
      %p90 = scmp.eq.s32.totalorder %s22, 0
      %p91 = por %p89, %p90
      %s93 = sadd.s32 %s92, 1
      %p96 = scmp.eq.s32.totalorder %s16, 1
      %p97 = scmp.ne.s32.totalorder %s92, %s94
      %p98 = scmp.eq.s32.totalorder %s16, 0
      %p99 = por %p97, %p98
      %p100 = scmp.ne.s32.totalorder %s92, %s94
      %p101 = scmp.eq.s32.totalorder %s21, 1
      %p102 = por %p100, %p101
      %p103 = scmp.ne.s32.totalorder %s94, %s95
      %p104 = scmp.eq.s32.totalorder %s21, 0
      %p105 = por %p103, %p104
      %p106 = scmp.ne.s32.totalorder %s94, %s95
      %p107 = scmp.eq.s32.totalorder %s22, 1
      %p108 = por %p106, %p107
      %p110 = scmp.ne.s32.totalorder %s95, %s109
      %p111 = scmp.eq.s32.totalorder %s22, 0
      %p112 = por %p110, %p111
      %s114 = sadd.s32 %s113, 1
      %p117 = scmp.eq.s32.totalorder %s16, 1
      %p118 = scmp.ne.s32.totalorder %s113, %s115
      %p119 = scmp.eq.s32.totalorder %s16, 0
      %p120 = por %p118, %p119
      %p121 = scmp.ne.s32.totalorder %s113, %s115
      %p122 = scmp.eq.s32.totalorder %s21, 1
      %p123 = por %p121, %p122
      %p124 = scmp.ne.s32.totalorder %s115, %s116
      %p125 = scmp.eq.s32.totalorder %s21, 0
      %p126 = por %p124, %p125
      %p127 = scmp.ne.s32.totalorder %s115, %s116
      %p128 = scmp.eq.s32.totalorder %s22, 1
      %p129 = por %p127, %p128
      %p131 = scmp.ne.s32.totalorder %s116, %s130
      %p132 = scmp.eq.s32.totalorder %s22, 0
      %p133 = por %p131, %p132
      %s135 = sadd.s32 %s134, 1
      %p138 = scmp.eq.s32.totalorder %s16, 1
      %p139 = scmp.ne.s32.totalorder %s134, %s136
      %p140 = scmp.eq.s32.totalorder %s16, 0
      %p141 = por %p139, %p140
      %p142 = scmp.ne.s32.totalorder %s134, %s136
      %p143 = scmp.eq.s32.totalorder %s21, 1
      %p144 = por %p142, %p143
      %p145 = scmp.ne.s32.totalorder %s136, %s137
      %p146 = scmp.eq.s32.totalorder %s21, 0
      %p147 = por %p145, %p146
      %p148 = scmp.ne.s32.totalorder %s136, %s137
      %p149 = scmp.eq.s32.totalorder %s22, 1
      %p150 = por %p148, %p149
      %p152 = scmp.ne.s32.totalorder %s137, %s151
      %p153 = scmp.eq.s32.totalorder %s22, 0
      %p154 = por %p152, %p153
      %s156 = sadd.s32 %s155, 1
      %p159 = scmp.eq.s32.totalorder %s16, 1
      %p160 = scmp.ne.s32.totalorder %s155, %s157
      %p161 = scmp.eq.s32.totalorder %s16, 0
      %p162 = por %p160, %p161
      %p163 = scmp.ne.s32.totalorder %s155, %s157
      %p164 = scmp.eq.s32.totalorder %s21, 1
      %p165 = por %p163, %p164
      %p166 = scmp.ne.s32.totalorder %s157, %s158
      %p167 = scmp.eq.s32.totalorder %s21, 0
      %p168 = por %p166, %p167
      %p169 = scmp.ne.s32.totalorder %s157, %s158
      %p170 = scmp.eq.s32.totalorder %s22, 1
      %p171 = por %p169, %p170
      %p173 = scmp.ne.s32.totalorder %s158, %s172
      %p174 = scmp.eq.s32.totalorder %s22, 0
      %p175 = por %p173, %p174
      %s176 = ssub.s32 %s16, %s23
      %p177 = scmp.eq.s32.totalorder %s176, 0
      %s179 = sadd.s32 %s178, 1
      %s180 = scalar_select %p177, %s178, %s179
      %p183 = pneg %p177
      %p184 = scmp.eq.s32.totalorder %s16, 1
      %p185 = por %p183, %p184
      %p186 = scmp.ne.s32.totalorder %s178, %s181
      %p187 = scmp.eq.s32.totalorder %s16, 0
      %p188 = por %p186, %p187
      %p189 = scmp.ne.s32.totalorder %s178, %s181
      %p190 = scmp.eq.s32.totalorder %s21, 1
      %p191 = por %p189, %p190
      %p192 = scmp.ne.s32.totalorder %s181, %s182
      %p193 = scmp.eq.s32.totalorder %s21, 0
      %p194 = por %p192, %p193
      %p195 = scmp.ne.s32.totalorder %s181, %s182
      %p196 = scmp.eq.s32.totalorder %s22, 1
      %p197 = por %p195, %p196
      %p199 = scmp.ne.s32.totalorder %s182, %s198
      %p200 = scmp.eq.s32.totalorder %s22, 0
      %p201 = por %p199, %p200
      %p202 = scmp.le.s32.totalorder 1, %s16
      %p203 = scmp.lt.s32.totalorder %s16, 3
      %p204 = pnand %p202, %p203
      %p205 = pneg %p204
      // Predicated region
      $region9: #{bottleneck_forward.1} parent=5 // pred_check
        _
      $region10: #{bottleneck_forward.1} parent=5 // pred_check_branch
        %207 = sbr.rel (%p204) target = $region12
      $region11: #{bottleneck_forward.1} parent=5 // pred_region
        %s208 = ssub.s32 %s16, 1
        // Predicated region
        $region13: #{bottleneck_forward.1} parent=11 // pred_check
          %p209 = pneg %p63
        $region14: #{bottleneck_forward.1} parent=11 // pred_check_branch
          %211 = sbr.rel (%p209) target = $region16
        $region15: #{bottleneck_forward.1} parent=11 // pred_region
          _
        $region16: #{bottleneck_forward.1} parent=11 // pred_fallthru
          _
        // Predicated region
        $region17: #{bottleneck_forward.1} parent=11 // pred_check
          %p212 = pneg %p84
        $region18: #{bottleneck_forward.1} parent=11 // pred_check_branch
          %214 = sbr.rel (%p212) target = $region20
        $region19: #{bottleneck_forward.1} parent=11 // pred_region
          _
        $region20: #{bottleneck_forward.1} parent=11 // pred_fallthru
          _
        // Predicated region
        $region21: #{bottleneck_forward.1} parent=11 // pred_check
          %p215 = pneg %p105
        $region22: #{bottleneck_forward.1} parent=11 // pred_check_branch
          %217 = sbr.rel (%p215) target = $region24
        $region23: #{bottleneck_forward.1} parent=11 // pred_region
          _
        $region24: #{bottleneck_forward.1} parent=11 // pred_fallthru
          _
        // Predicated region
        $region25: #{bottleneck_forward.1} parent=11 // pred_check
          %p218 = pneg %p126
        $region26: #{bottleneck_forward.1} parent=11 // pred_check_branch
          %220 = sbr.rel (%p218) target = $region28
        $region27: #{bottleneck_forward.1} parent=11 // pred_region
          _
        $region28: #{bottleneck_forward.1} parent=11 // pred_fallthru
          _
        // Predicated region
        $region29: #{bottleneck_forward.1} parent=11 // pred_check
          %p221 = pneg %p147
        $region30: #{bottleneck_forward.1} parent=11 // pred_check_branch
          %223 = sbr.rel (%p221) target = $region32
        $region31: #{bottleneck_forward.1} parent=11 // pred_region
          _
        $region32: #{bottleneck_forward.1} parent=11 // pred_fallthru
          _
        // Predicated region
        $region33: #{bottleneck_forward.1} parent=11 // pred_check
          %p224 = pneg %p168
        $region34: #{bottleneck_forward.1} parent=11 // pred_check_branch
          %226 = sbr.rel (%p224) target = $region36
        $region35: #{bottleneck_forward.1} parent=11 // pred_region
          _
        $region36: #{bottleneck_forward.1} parent=11 // pred_fallthru
          _
      $region12: #{bottleneck_forward.1} parent=5 // pred_fallthru
        _
      %p227 = scmp.lt.s32.totalorder %s16, 2
      // Predicated region
      $region37: #{bottleneck_forward.1} parent=5 // pred_check
        %p228 = pneg %p227
      $region38: #{bottleneck_forward.1} parent=5 // pred_check_branch
        %230 = sbr.rel (%p228) target = $region40
      $region39: #{bottleneck_forward.1} parent=5 // pred_region
        // Predicated region
        $region41: #{bottleneck_forward.1} parent=39 // pred_check
          %p231 = pneg %p36
        $region42: #{bottleneck_forward.1} parent=39 // pred_check_branch
          %233 = sbr.rel (%p231) target = $region44
        $region43: #{bottleneck_forward.1} parent=39 // pred_region
          %p234 = scmp.lt.s32.totalorder %s16, 1
          %s235 = scalar_select %p234, %s16, 1
          %s236 = smul.addr %s235, 2
          %s237 = smul.addr %s236, 8
          %s238 = scalar_lea.vmem %s0, %s237
        $region44: #{bottleneck_forward.1} parent=39 // pred_fallthru
          _
      $region40: #{bottleneck_forward.1} parent=5 // pred_fallthru
        _
      %p239 = scmp.le.s32.totalorder 1, %s16
      %p240 = scmp.lt.s32.totalorder %s16, 3
      %p241 = pnand %p239, %p240
      %p242 = pneg %p241
      // Predicated region
      $region45: #{bottleneck_forward.1} parent=5 // pred_check
        _
      $region46: #{bottleneck_forward.1} parent=5 // pred_check_branch
        %244 = sbr.rel (%p241) target = $region48
      $region47: #{bottleneck_forward.1} parent=5 // pred_region
        %s245 = ssub.s32 %s16, 1
        %p246 = scmp.lt.s32.totalorder %s21, 1
        %s247 = scalar_select %p246, %s21, 1
        %s248 = smul.addr %s247, 2
        %s249 = smul.addr %s248, 8
        %s250 = scalar_lea.vmem %s0, %s249
        %p251 = pneg %p42
        %p252 = pneg %p39
        %p253 = pneg %p63
        %p254 = pneg %p60
        %p255 = pneg %p84
        %p256 = pneg %p81
        %p257 = pneg %p105
        %p258 = pneg %p102
        %p259 = pneg %p126
        %p260 = pneg %p123
        %p261 = pneg %p147
        %p262 = pneg %p144
        %p263 = pneg %p168
        %p264 = pneg %p165
        %p265 = pneg %p194
        %p266 = pneg %p191
        %s267 = sand.u32 %s181, 1
        %s268 = scalar_lea.sflag [#allocation3], %s267
        %s269 = sand.u32 %s181, 1
        %s270 = smul.addr %s269, 16
        %s271 = scalar_lea.vmem [#allocation2], %s270
        %p272 = scmp.lt.s32.totalorder %s21, 1
        %s273 = scalar_select %p272, %s21, 1
        %s274 = smul.addr %s273, 2
        %s275 = smul.addr %s274, 8
        %s276 = scalar_lea.vmem %s0, %s275
        %v278 = vld [vmem:[%s276] sm:$0xff]
        %v279 = vld [vmem:[%s276 + $0x8] sm:$0xff]
        %v280 = vld [vmem:[%s1] sm:$0xf]
        %v281 = vld [vmem:[%s1 + $0x4] sm:$0xf]
        %v282 = vld [vmem:[%s1 + $0x8] sm:$0xf]
        %v283 = vld [vmem:[%s1 + $0xc] sm:$0xf]
        %v284 = vld [vmem:[%s1 + $0x10] sm:$0xf]
        %v285 = vld [vmem:[%s1 + $0x14] sm:$0xf]
        %v286 = vld [vmem:[%s1 + $0x18] sm:$0xf]
        %v287 = vld [vmem:[%s1 + $0x1c] sm:$0xf]
        %v288 = vld [vmem:[%s1 + $0x20] sm:$0xf]
        %v289 = vld [vmem:[%s1 + $0x24] sm:$0xf]
        %v290 = vld [vmem:[%s1 + $0x28] sm:$0xf]
        %v291 = vld [vmem:[%s1 + $0x2c] sm:$0xf]
        %v292 = vpack.c.bf16 %v279, %v278
        %v293 = vld [vmem:[%s2] sm:$0xff]
        %v294 = vld [vmem:[%s2 + $0x8] sm:$0xff]
        %v295 = vld [vmem:[%s2 + $0x10] sm:$0xff]
        %v296 = vld [vmem:[%s2 + $0x18] sm:$0xff]
        %v297 = vld [vmem:[%s2 + $0x20] sm:$0xff]
        %v298 = vld [vmem:[%s2 + $0x28] sm:$0xff]
        %v299 = vld [vmem:[%s2 + $0x30] sm:$0xff]
        %v300 = vld [vmem:[%s2 + $0x38] sm:$0xff]
        %v301 = vld [vmem:[%s2 + $0x40] sm:$0xff]
        %v302 = vld [vmem:[%s2 + $0x48] sm:$0xff]
        %v303 = vld [vmem:[%s2 + $0x50] sm:$0xff]
        %v304 = vld [vmem:[%s2 + $0x58] sm:$0xff]
        %306 = vset.pattern.permute.xlu0 0
        %307 = vperm.xlu0 %306, %v293
        %v308 = vpop.permute.xlu0 %307
        %311 = vset.pattern.permute.xlu0 0
        %312 = vperm.xlu0 %311, %v294
        %v313 = vpop.permute.xlu0 %312
        %316 = vset.pattern.permute.xlu0 0
        %317 = vperm.xlu0 %316, %v295
        %v318 = vpop.permute.xlu0 %317
        %321 = vset.pattern.permute.xlu0 0
        %322 = vperm.xlu0 %321, %v296
        %v323 = vpop.permute.xlu0 %322
        %326 = vset.pattern.permute.xlu0 0
        %327 = vperm.xlu0 %326, %v297
        %v328 = vpop.permute.xlu0 %327
        %331 = vset.pattern.permute.xlu0 0
        %332 = vperm.xlu0 %331, %v298
        %v333 = vpop.permute.xlu0 %332
        %336 = vset.pattern.permute.xlu0 0
        %337 = vperm.xlu0 %336, %v299
        %v338 = vpop.permute.xlu0 %337
        %341 = vset.pattern.permute.xlu0 0
        %342 = vperm.xlu0 %341, %v300
        %v343 = vpop.permute.xlu0 %342
        %346 = vset.pattern.permute.xlu0 0
        %347 = vperm.xlu0 %346, %v301
        %v348 = vpop.permute.xlu0 %347
        %351 = vset.pattern.permute.xlu0 0
        %352 = vperm.xlu0 %351, %v302
        %v353 = vpop.permute.xlu0 %352
        %356 = vset.pattern.permute.xlu0 0
        %357 = vperm.xlu0 %356, %v303
        %v358 = vpop.permute.xlu0 %357
        %361 = vset.pattern.permute.xlu0 0
        %362 = vperm.xlu0 %361, %v304
        %v363 = vpop.permute.xlu0 %362
        %v377 = vunpack.c.l.b16 %v280
        %v378 = vunpack.c.l.b16 %v281
        %v379 = vunpack.c.l.b16 %v282
        %v380 = vunpack.c.l.b16 %v283
        %v381 = vunpack.c.l.b16 %v284
        %v382 = vunpack.c.l.b16 %v285
        %v383 = vunpack.c.l.b16 %v286
        %v384 = vunpack.c.l.b16 %v287
        %v385 = vunpack.c.l.b16 %v288
        %v386 = vunpack.c.l.b16 %v289
        %v387 = vunpack.c.l.b16 %v290
        %v388 = vunpack.c.l.b16 %v291
        %v389 = vpack.c.b16 %v378, %v377
        %v390 = vpack.c.b16 %v380, %v379
        %v391 = vpack.c.b16 %v382, %v381
        %v392 = vpack.c.b16 %v384, %v383
        %v393 = vpack.c.b16 %v386, %v385
        %v394 = vpack.c.b16 %v388, %v387
        %vm395 = vcmask 130048
        %v397 = vsel %vm395, %v389, 0
        %v400 = vsel %vm395, %v390, 0
        %v403 = vsel %vm395, %v391, 0
        %v406 = vsel %vm395, %v392, 0
        %v409 = vsel %vm395, %v393, 0
        %v412 = vsel %vm395, %v394, 0
        %414 = vmatprep.subr.bf16.mxu0 0
        %415 = vmatpush1.bf16.msra.mxu0 %v292
        %416 = vmatprep.subr.bf16.mxu0 0
        %417 = vmatpush1.bf16.msra.mxu0 0
        %418 = vmatprep.subr.bf16.mxu0 0
        %419 = vmatpush1.bf16.msra.mxu0 0
        %420 = vmatprep.subr.bf16.mxu0 0
        %421 = vmatpush1.bf16.msra.mxu0 0
        %422 = vmatprep.subr.bf16.mxu0 0
        %423 = vmatpush1.bf16.msra.mxu0 0
        %424 = vmatprep.subr.bf16.mxu0 0
        %425 = vmatpush1.bf16.msra.mxu0 0
        %426 = vmatprep.subr.bf16.mxu0 0
        %427 = vmatpush1.bf16.msra.mxu0 0
        %428 = vmatprep.subr.bf16.mxu0 0
        %429 = vmatpush1.bf16.msra.mxu0 0
        %430 = vmatprep.subr.bf16.mxu0 0
        %431 = vmatpush1.bf16.msra.mxu0 0
        %432 = vmatprep.subr.bf16.mxu0 0
        %433 = vmatpush1.bf16.msra.mxu0 0
        %434 = vmatprep.subr.bf16.mxu0 0
        %435 = vmatpush1.bf16.msra.mxu0 0
        %436 = vmatprep.subr.bf16.mxu0 0
        %437 = vmatpush1.bf16.msra.mxu0 0
        %438 = vmatprep.subr.bf16.mxu0 0
        %439 = vmatpush1.bf16.msra.mxu0 0
        %440 = vmatprep.subr.bf16.mxu0 0
        %441 = vmatpush1.bf16.msra.mxu0 0
        %442 = vmatprep.subr.bf16.mxu0 0
        %443 = vmatpush1.bf16.msra.mxu0 0
        %444 = vmatprep.subr.bf16.mxu0 0
        %445 = vmatpush1.bf16.msra.mxu0 0
        %446 = vmatprep.mubr.bf16.mxu0 0
        %447 = vmatmul.mubr.bf16.gmra.mrb[0].mxu0 %v397
        %v448 = vpop.f32.mrb[0].mxu0
        %v449 = vadd.f32 %v308, %v448
        %v450 = vpop.f32.mrb[0].mxu0
        %v451 = vpop.f32.mrb[0].mxu0
        %v452 = vadd.f32 %v313, %v451
        %v453 = vpop.f32.mrb[0].mxu0
        %454 = vmatprep.mubr.bf16.mxu0 0
        %455 = vmatmul.mubr.bf16.gmra.mrb[0].mxu0 %v400
        %v456 = vpop.f32.mrb[0].mxu0
        %v457 = vadd.f32 %v318, %v456
        %v458 = vpop.f32.mrb[0].mxu0
        %v459 = vpop.f32.mrb[0].mxu0
        %v460 = vadd.f32 %v323, %v459
        %v461 = vpop.f32.mrb[0].mxu0
        %462 = vmatprep.mubr.bf16.mxu0 0
        %463 = vmatmul.mubr.bf16.gmra.mrb[0].mxu0 %v403
        %v464 = vpop.f32.mrb[0].mxu0
        %v465 = vadd.f32 %v328, %v464
        %v466 = vpop.f32.mrb[0].mxu0
        %v467 = vpop.f32.mrb[0].mxu0
        %v468 = vadd.f32 %v333, %v467
        %v469 = vpop.f32.mrb[0].mxu0
        %470 = vmatprep.mubr.bf16.mxu0 0
        %471 = vmatmul.mubr.bf16.gmra.mrb[0].mxu0 %v406
        %v472 = vpop.f32.mrb[0].mxu0
        %v473 = vadd.f32 %v338, %v472
        %v474 = vpop.f32.mrb[0].mxu0
        %v475 = vpop.f32.mrb[0].mxu0
        %v476 = vadd.f32 %v343, %v475
        %v477 = vpop.f32.mrb[0].mxu0
        %478 = vmatprep.mubr.bf16.mxu0 0
        %479 = vmatmul.mubr.bf16.gmra.mrb[0].mxu0 %v409
        %v480 = vpop.f32.mrb[0].mxu0
        %v481 = vadd.f32 %v348, %v480
        %v482 = vpop.f32.mrb[0].mxu0
        %v483 = vpop.f32.mrb[0].mxu0
        %v484 = vadd.f32 %v353, %v483
        %v485 = vpop.f32.mrb[0].mxu0
        %486 = vmatprep.mubr.bf16.mxu0 0
        %487 = vmatmul.mubr.bf16.gmra.mrb[0].mxu0 %v412
        %v488 = vpop.f32.mrb[0].mxu0
        %v489 = vadd.f32 %v358, %v488
        %v490 = vpop.f32.mrb[0].mxu0
        %v491 = vpop.f32.mrb[0].mxu0
        %v492 = vadd.f32 %v363, %v491
        %v493 = vpop.f32.mrb[0].mxu0
        %494 = vdwg.mxu0
        %v495 = vmax.f32 %v449, 0.0
        %v496 = vmax.f32 %v452, 0.0
        %v497 = vmax.f32 %v457, 0.0
        %v498 = vmax.f32 %v460, 0.0
        %v499 = vmax.f32 %v465, 0.0
        %v500 = vmax.f32 %v468, 0.0
        %v501 = vmax.f32 %v473, 0.0
        %v502 = vmax.f32 %v476, 0.0
        %v503 = vmax.f32 %v481, 0.0
        %v504 = vmax.f32 %v484, 0.0
        %v505 = vmax.f32 %v489, 0.0
        %v506 = vmax.f32 %v492, 0.0
        %v507 = vmin.f32 %v495, 6.0
        %v508 = vmin.f32 %v496, 6.0
        %v509 = vmin.f32 %v497, 6.0
        %v510 = vmin.f32 %v498, 6.0
        %v511 = vmin.f32 %v499, 6.0
        %v512 = vmin.f32 %v500, 6.0
        %v513 = vmin.f32 %v501, 6.0
        %v514 = vmin.f32 %v502, 6.0
        %v515 = vmin.f32 %v503, 6.0
        %v516 = vmin.f32 %v504, 6.0
        %v517 = vmin.f32 %v505, 6.0
        %v518 = vmin.f32 %v506, 6.0
        %v519 = vlaneseq
        %v520 = vand.u32 %v519, 127
        %vm521 = vcmp.gt.s32.totalorder %v520, 0
        %v522 = vsel %vm521, 1, 0
        %v523 = vcvt.s32.f32 %v522
        %vm524 = vcmp.lt.s32.totalorder %v520, 127
        %v525 = vsel %vm524, 1, 0
        %v526 = vcvt.s32.f32 %v525
        %527 = vrot.lane.b32.xlu0 %v507, 1
        %v528 = vpop.permute.xlu0 %527
        %529 = vrot.lane.b32.xlu0 %v508, 1
        %v530 = vpop.permute.xlu0 %529
        %531 = vrot.lane.b32.xlu0 %v509, 1
        %v532 = vpop.permute.xlu0 %531
        %533 = vrot.lane.b32.xlu0 %v510, 1
        %v534 = vpop.permute.xlu0 %533
        %535 = vrot.lane.b32.xlu0 %v511, 1
        %v536 = vpop.permute.xlu0 %535
        %537 = vrot.lane.b32.xlu0 %v512, 1
        %v538 = vpop.permute.xlu0 %537
        %539 = vrot.lane.b32.xlu0 %v513, 1
        %v540 = vpop.permute.xlu0 %539
        %541 = vrot.lane.b32.xlu0 %v514, 1
        %v542 = vpop.permute.xlu0 %541
        %543 = vrot.lane.b32.xlu0 %v515, 1
        %v544 = vpop.permute.xlu0 %543
        %545 = vrot.lane.b32.xlu0 %v516, 1
        %v546 = vpop.permute.xlu0 %545
        %547 = vrot.lane.b32.xlu0 %v517, 1
        %v548 = vpop.permute.xlu0 %547
        %549 = vrot.lane.b32.xlu0 %v518, 1
        %v550 = vpop.permute.xlu0 %549
        %v551 = vmul.f32 %v528, %v523
        %v552 = vmul.f32 %v530, %v523
        %v553 = vmul.f32 %v532, %v523
        %v554 = vmul.f32 %v534, %v523
        %v555 = vmul.f32 %v536, %v523
        %v556 = vmul.f32 %v538, %v523
        %v557 = vmul.f32 %v540, %v523
        %v558 = vmul.f32 %v542, %v523
        %v559 = vmul.f32 %v544, %v523
        %v560 = vmul.f32 %v546, %v523
        %v561 = vmul.f32 %v548, %v523
        %v562 = vmul.f32 %v550, %v523
        %563 = vrot.lane.b32.xlu0 %v507, 127
        %v564 = vpop.permute.xlu0 %563
        %565 = vrot.lane.b32.xlu0 %v508, 127
        %v566 = vpop.permute.xlu0 %565
        %567 = vrot.lane.b32.xlu0 %v509, 127
        %v568 = vpop.permute.xlu0 %567
        %569 = vrot.lane.b32.xlu0 %v510, 127
        %v570 = vpop.permute.xlu0 %569
        %571 = vrot.lane.b32.xlu0 %v511, 127
        %v572 = vpop.permute.xlu0 %571
        %573 = vrot.lane.b32.xlu0 %v512, 127
        %v574 = vpop.permute.xlu0 %573
        %575 = vrot.lane.b32.xlu0 %v513, 127
        %v576 = vpop.permute.xlu0 %575
        %577 = vrot.lane.b32.xlu0 %v514, 127
        %v578 = vpop.permute.xlu0 %577
        %579 = vrot.lane.b32.xlu0 %v515, 127
        %v580 = vpop.permute.xlu0 %579
        %581 = vrot.lane.b32.xlu0 %v516, 127
        %v582 = vpop.permute.xlu0 %581
        %583 = vrot.lane.b32.xlu0 %v517, 127
        %v584 = vpop.permute.xlu0 %583
        %585 = vrot.lane.b32.xlu0 %v518, 127
        %v586 = vpop.permute.xlu0 %585
        %v587 = vmul.f32 %v564, %v526
        %v588 = vmul.f32 %v566, %v526
        %v589 = vmul.f32 %v568, %v526
        %v590 = vmul.f32 %v570, %v526
        %v591 = vmul.f32 %v572, %v526
        %v592 = vmul.f32 %v574, %v526
        %v593 = vmul.f32 %v576, %v526
        %v594 = vmul.f32 %v578, %v526
        %v595 = vmul.f32 %v580, %v526
        %v596 = vmul.f32 %v582, %v526
        %v597 = vmul.f32 %v584, %v526
        %v598 = vmul.f32 %v586, %v526
        %v599 = vld [vmem:[%s3] sm:$0xff]
        %v600 = vld [vmem:[%s3 + $0x8] sm:$0xff]
        %v601 = vld [vmem:[%s3 + $0x10] sm:$0xff]
        %v602 = vld [vmem:[%s3 + $0x18] sm:$0xff]
        %v603 = vld [vmem:[%s3 + $0x20] sm:$0xff]
        %v604 = vld [vmem:[%s3 + $0x28] sm:$0xff]
        %v605 = vld [vmem:[%s3 + $0x30] sm:$0xff]
        %v606 = vld [vmem:[%s3 + $0x38] sm:$0xff]
        %v607 = vld [vmem:[%s3 + $0x40] sm:$0xff]
        %v608 = vld [vmem:[%s3 + $0x48] sm:$0xff]
        %v609 = vld [vmem:[%s3 + $0x50] sm:$0xff]
        %v610 = vld [vmem:[%s3 + $0x58] sm:$0xff]
        %612 = vset.pattern.permute.xlu0 0
        %613 = vperm.xlu0 %612, %v599
        %v614 = vpop.permute.xlu0 %613
        %617 = vset.pattern.permute.xlu0 0
        %618 = vperm.xlu0 %617, %v600
        %v619 = vpop.permute.xlu0 %618
        %622 = vset.pattern.permute.xlu0 0
        %623 = vperm.xlu0 %622, %v601
        %v624 = vpop.permute.xlu0 %623
        %627 = vset.pattern.permute.xlu0 0
        %628 = vperm.xlu0 %627, %v602
        %v629 = vpop.permute.xlu0 %628
        %632 = vset.pattern.permute.xlu0 0
        %633 = vperm.xlu0 %632, %v603
        %v634 = vpop.permute.xlu0 %633
        %637 = vset.pattern.permute.xlu0 0
        %638 = vperm.xlu0 %637, %v604
        %v639 = vpop.permute.xlu0 %638
        %642 = vset.pattern.permute.xlu0 0
        %643 = vperm.xlu0 %642, %v605
        %v644 = vpop.permute.xlu0 %643
        %647 = vset.pattern.permute.xlu0 0
        %648 = vperm.xlu0 %647, %v606
        %v649 = vpop.permute.xlu0 %648
        %652 = vset.pattern.permute.xlu0 0
        %653 = vperm.xlu0 %652, %v607
        %v654 = vpop.permute.xlu0 %653
        %657 = vset.pattern.permute.xlu0 0
        %658 = vperm.xlu0 %657, %v608
        %v659 = vpop.permute.xlu0 %658
        %662 = vset.pattern.permute.xlu0 0
        %663 = vperm.xlu0 %662, %v609
        %v664 = vpop.permute.xlu0 %663
        %667 = vset.pattern.permute.xlu0 0
        %668 = vperm.xlu0 %667, %v610
        %v669 = vpop.permute.xlu0 %668
        %v671 = vmul.f32 %v614, %v551
        %v672 = vmul.f32 %v619, %v552
        %v673 = vmul.f32 %v624, %v553
        %v674 = vmul.f32 %v629, %v554
        %v675 = vmul.f32 %v634, %v555
        %v676 = vmul.f32 %v639, %v556
        %v677 = vmul.f32 %v644, %v557
        %v678 = vmul.f32 %v649, %v558
        %v679 = vmul.f32 %v654, %v559
        %v680 = vmul.f32 %v659, %v560
        %v681 = vmul.f32 %v664, %v561
        %v682 = vmul.f32 %v669, %v562
        %s683 = scalar_lea.vmem %s3, 96
        %v684 = vld [vmem:[%s683] sm:$0xff]
        %v685 = vld [vmem:[%s683 + $0x8] sm:$0xff]
        %v686 = vld [vmem:[%s683 + $0x10] sm:$0xff]
        %v687 = vld [vmem:[%s683 + $0x18] sm:$0xff]
        %v688 = vld [vmem:[%s683 + $0x20] sm:$0xff]
        %v689 = vld [vmem:[%s683 + $0x28] sm:$0xff]
        %v690 = vld [vmem:[%s683 + $0x30] sm:$0xff]
        %v691 = vld [vmem:[%s683 + $0x38] sm:$0xff]
        %v692 = vld [vmem:[%s683 + $0x40] sm:$0xff]
        %v693 = vld [vmem:[%s683 + $0x48] sm:$0xff]
        %v694 = vld [vmem:[%s683 + $0x50] sm:$0xff]
        %v695 = vld [vmem:[%s683 + $0x58] sm:$0xff]
        %697 = vset.pattern.permute.xlu0 0
        %698 = vperm.xlu0 %697, %v684
        %v699 = vpop.permute.xlu0 %698
        %702 = vset.pattern.permute.xlu0 0
        %703 = vperm.xlu0 %702, %v685
        %v704 = vpop.permute.xlu0 %703
        %707 = vset.pattern.permute.xlu0 0
        %708 = vperm.xlu0 %707, %v686
        %v709 = vpop.permute.xlu0 %708
        %712 = vset.pattern.permute.xlu0 0
        %713 = vperm.xlu0 %712, %v687
        %v714 = vpop.permute.xlu0 %713
        %717 = vset.pattern.permute.xlu0 0
        %718 = vperm.xlu0 %717, %v688
        %v719 = vpop.permute.xlu0 %718
        %722 = vset.pattern.permute.xlu0 0
        %723 = vperm.xlu0 %722, %v689
        %v724 = vpop.permute.xlu0 %723
        %727 = vset.pattern.permute.xlu0 0
        %728 = vperm.xlu0 %727, %v690
        %v729 = vpop.permute.xlu0 %728
        %732 = vset.pattern.permute.xlu0 0
        %733 = vperm.xlu0 %732, %v691
        %v734 = vpop.permute.xlu0 %733
        %737 = vset.pattern.permute.xlu0 0
        %738 = vperm.xlu0 %737, %v692
        %v739 = vpop.permute.xlu0 %738
        %742 = vset.pattern.permute.xlu0 0
        %743 = vperm.xlu0 %742, %v693
        %v744 = vpop.permute.xlu0 %743
        %747 = vset.pattern.permute.xlu0 0
        %748 = vperm.xlu0 %747, %v694
        %v749 = vpop.permute.xlu0 %748
        %752 = vset.pattern.permute.xlu0 0
        %753 = vperm.xlu0 %752, %v695
        %v754 = vpop.permute.xlu0 %753
        %v756 = vmul.f32 %v699, %v507
        %v757 = vmul.f32 %v704, %v508
        %v758 = vmul.f32 %v709, %v509
        %v759 = vmul.f32 %v714, %v510
        %v760 = vmul.f32 %v719, %v511
        %v761 = vmul.f32 %v724, %v512
        %v762 = vmul.f32 %v729, %v513
        %v763 = vmul.f32 %v734, %v514
        %v764 = vmul.f32 %v739, %v515
        %v765 = vmul.f32 %v744, %v516
        %v766 = vmul.f32 %v749, %v517
        %v767 = vmul.f32 %v754, %v518
        %v768 = vadd.f32 %v671, %v756
        %v769 = vadd.f32 %v672, %v757
        %v770 = vadd.f32 %v673, %v758
        %v771 = vadd.f32 %v674, %v759
        %v772 = vadd.f32 %v675, %v760
        %v773 = vadd.f32 %v676, %v761
        %v774 = vadd.f32 %v677, %v762
        %v775 = vadd.f32 %v678, %v763
        %v776 = vadd.f32 %v679, %v764
        %v777 = vadd.f32 %v680, %v765
        %v778 = vadd.f32 %v681, %v766
        %v779 = vadd.f32 %v682, %v767
        %s780 = scalar_lea.vmem %s3, 192
        %v781 = vld [vmem:[%s780] sm:$0xff]
        %v782 = vld [vmem:[%s780 + $0x8] sm:$0xff]
        %v783 = vld [vmem:[%s780 + $0x10] sm:$0xff]
        %v784 = vld [vmem:[%s780 + $0x18] sm:$0xff]
        %v785 = vld [vmem:[%s780 + $0x20] sm:$0xff]
        %v786 = vld [vmem:[%s780 + $0x28] sm:$0xff]
        %v787 = vld [vmem:[%s780 + $0x30] sm:$0xff]
        %v788 = vld [vmem:[%s780 + $0x38] sm:$0xff]
        %v789 = vld [vmem:[%s780 + $0x40] sm:$0xff]
        %v790 = vld [vmem:[%s780 + $0x48] sm:$0xff]
        %v791 = vld [vmem:[%s780 + $0x50] sm:$0xff]
        %v792 = vld [vmem:[%s780 + $0x58] sm:$0xff]
        %794 = vset.pattern.permute.xlu0 0
        %795 = vperm.xlu0 %794, %v781
        %v796 = vpop.permute.xlu0 %795
        %799 = vset.pattern.permute.xlu0 0
        %800 = vperm.xlu0 %799, %v782
        %v801 = vpop.permute.xlu0 %800
        %804 = vset.pattern.permute.xlu0 0
        %805 = vperm.xlu0 %804, %v783
        %v806 = vpop.permute.xlu0 %805
        %809 = vset.pattern.permute.xlu0 0
        %810 = vperm.xlu0 %809, %v784
        %v811 = vpop.permute.xlu0 %810
        %814 = vset.pattern.permute.xlu0 0
        %815 = vperm.xlu0 %814, %v785
        %v816 = vpop.permute.xlu0 %815
        %819 = vset.pattern.permute.xlu0 0
        %820 = vperm.xlu0 %819, %v786
        %v821 = vpop.permute.xlu0 %820
        %824 = vset.pattern.permute.xlu0 0
        %825 = vperm.xlu0 %824, %v787
        %v826 = vpop.permute.xlu0 %825
        %829 = vset.pattern.permute.xlu0 0
        %830 = vperm.xlu0 %829, %v788
        %v831 = vpop.permute.xlu0 %830
        %834 = vset.pattern.permute.xlu0 0
        %835 = vperm.xlu0 %834, %v789
        %v836 = vpop.permute.xlu0 %835
        %839 = vset.pattern.permute.xlu0 0
        %840 = vperm.xlu0 %839, %v790
        %v841 = vpop.permute.xlu0 %840
        %844 = vset.pattern.permute.xlu0 0
        %845 = vperm.xlu0 %844, %v791
        %v846 = vpop.permute.xlu0 %845
        %849 = vset.pattern.permute.xlu0 0
        %850 = vperm.xlu0 %849, %v792
        %v851 = vpop.permute.xlu0 %850
        %v853 = vmul.f32 %v796, %v587
        %v854 = vmul.f32 %v801, %v588
        %v855 = vmul.f32 %v806, %v589
        %v856 = vmul.f32 %v811, %v590
        %v857 = vmul.f32 %v816, %v591
        %v858 = vmul.f32 %v821, %v592
        %v859 = vmul.f32 %v826, %v593
        %v860 = vmul.f32 %v831, %v594
        %v861 = vmul.f32 %v836, %v595
        %v862 = vmul.f32 %v841, %v596
        %v863 = vmul.f32 %v846, %v597
        %v864 = vmul.f32 %v851, %v598
        %v865 = vadd.f32 %v768, %v853
        %v866 = vadd.f32 %v769, %v854
        %v867 = vadd.f32 %v770, %v855
        %v868 = vadd.f32 %v771, %v856
        %v869 = vadd.f32 %v772, %v857
        %v870 = vadd.f32 %v773, %v858
        %v871 = vadd.f32 %v774, %v859
        %v872 = vadd.f32 %v775, %v860
        %v873 = vadd.f32 %v776, %v861
        %v874 = vadd.f32 %v777, %v862
        %v875 = vadd.f32 %v778, %v863
        %v876 = vadd.f32 %v779, %v864
        %v877 = vld [vmem:[%s4] sm:$0xff]
        %v878 = vld [vmem:[%s4 + $0x8] sm:$0xff]
        %v879 = vld [vmem:[%s4 + $0x10] sm:$0xff]
        %v880 = vld [vmem:[%s4 + $0x18] sm:$0xff]
        %v881 = vld [vmem:[%s4 + $0x20] sm:$0xff]
        %v882 = vld [vmem:[%s4 + $0x28] sm:$0xff]
        %v883 = vld [vmem:[%s4 + $0x30] sm:$0xff]
        %v884 = vld [vmem:[%s4 + $0x38] sm:$0xff]
        %v885 = vld [vmem:[%s4 + $0x40] sm:$0xff]
        %v886 = vld [vmem:[%s4 + $0x48] sm:$0xff]
        %v887 = vld [vmem:[%s4 + $0x50] sm:$0xff]
        %v888 = vld [vmem:[%s4 + $0x58] sm:$0xff]
        %890 = vset.pattern.permute.xlu0 0
        %891 = vperm.xlu0 %890, %v877
        %v892 = vpop.permute.xlu0 %891
        %895 = vset.pattern.permute.xlu0 0
        %896 = vperm.xlu0 %895, %v878
        %v897 = vpop.permute.xlu0 %896
        %900 = vset.pattern.permute.xlu0 0
        %901 = vperm.xlu0 %900, %v879
        %v902 = vpop.permute.xlu0 %901
        %905 = vset.pattern.permute.xlu0 0
        %906 = vperm.xlu0 %905, %v880
        %v907 = vpop.permute.xlu0 %906
        %910 = vset.pattern.permute.xlu0 0
        %911 = vperm.xlu0 %910, %v881
        %v912 = vpop.permute.xlu0 %911
        %915 = vset.pattern.permute.xlu0 0
        %916 = vperm.xlu0 %915, %v882
        %v917 = vpop.permute.xlu0 %916
        %920 = vset.pattern.permute.xlu0 0
        %921 = vperm.xlu0 %920, %v883
        %v922 = vpop.permute.xlu0 %921
        %925 = vset.pattern.permute.xlu0 0
        %926 = vperm.xlu0 %925, %v884
        %v927 = vpop.permute.xlu0 %926
        %930 = vset.pattern.permute.xlu0 0
        %931 = vperm.xlu0 %930, %v885
        %v932 = vpop.permute.xlu0 %931
        %935 = vset.pattern.permute.xlu0 0
        %936 = vperm.xlu0 %935, %v886
        %v937 = vpop.permute.xlu0 %936
        %940 = vset.pattern.permute.xlu0 0
        %941 = vperm.xlu0 %940, %v887
        %v942 = vpop.permute.xlu0 %941
        %945 = vset.pattern.permute.xlu0 0
        %946 = vperm.xlu0 %945, %v888
        %v947 = vpop.permute.xlu0 %946
        %v949 = vadd.f32 %v865, %v892
        %v950 = vadd.f32 %v866, %v897
        %v951 = vadd.f32 %v867, %v902
        %v952 = vadd.f32 %v868, %v907
        %v953 = vadd.f32 %v869, %v912
        %v954 = vadd.f32 %v870, %v917
        %v955 = vadd.f32 %v871, %v922
        %v956 = vadd.f32 %v872, %v927
        %v957 = vadd.f32 %v873, %v932
        %v958 = vadd.f32 %v874, %v937
        %v959 = vadd.f32 %v875, %v942
        %v960 = vadd.f32 %v876, %v947
        %v961 = vmax.f32 %v949, 0.0
        %v962 = vmax.f32 %v950, 0.0
        %v963 = vmax.f32 %v951, 0.0
        %v964 = vmax.f32 %v952, 0.0
        %v965 = vmax.f32 %v953, 0.0
        %v966 = vmax.f32 %v954, 0.0
        %v967 = vmax.f32 %v955, 0.0
        %v968 = vmax.f32 %v956, 0.0
        %v969 = vmax.f32 %v957, 0.0
        %v970 = vmax.f32 %v958, 0.0
        %v971 = vmax.f32 %v959, 0.0
        %v972 = vmax.f32 %v960, 0.0
        %v973 = vmin.f32 %v961, 6.0
        %v974 = vmin.f32 %v962, 6.0
        %v975 = vmin.f32 %v963, 6.0
        %v976 = vmin.f32 %v964, 6.0
        %v977 = vmin.f32 %v965, 6.0
        %v978 = vmin.f32 %v966, 6.0
        %v979 = vmin.f32 %v967, 6.0
        %v980 = vmin.f32 %v968, 6.0
        %v981 = vmin.f32 %v969, 6.0
        %v982 = vmin.f32 %v970, 6.0
        %v983 = vmin.f32 %v971, 6.0
        %v984 = vmin.f32 %v972, 6.0
        %v985 = vld [vmem:[%s5] sm:$0xf]
        %v986 = vld [vmem:[%s5 + $0x4] sm:$0xf]
        %v987 = vpack.c.bf16 %v974, %v973
        %v988 = vpack.c.bf16 %v976, %v975
        %v989 = vpack.c.bf16 %v978, %v977
        %v990 = vpack.c.bf16 %v980, %v979
        %v991 = vpack.c.bf16 %v982, %v981
        %v992 = vpack.c.bf16 %v984, %v983
        %v993 = vld [vmem:[%s6] sm:$0xff]
        %v994 = vld [vmem:[%s6 + $0x8] sm:$0xff]
        %996 = vset.pattern.permute.xlu0 0
        %997 = vperm.xlu0 %996, %v993
        %v998 = vpop.permute.xlu0 %997
        %1001 = vset.pattern.permute.xlu0 0
        %1002 = vperm.xlu0 %1001, %v994
        %v1003 = vpop.permute.xlu0 %1002
        %v1007 = vunpack.c.l.b16 %v985
        %v1008 = vunpack.c.l.b16 %v986
        %v1009 = vpack.c.b16 %v1008, %v1007
        %vm1010 = vcmask 785408
        %v1012 = vsel %vm1010, %v1009, 0
        %1014 = vmatprep.subr.bf16.mxu0 0
        %1015 = vmatpush1.bf16.msra.mxu0 %v987
        %1016 = vmatprep.subr.bf16.mxu0 0
        %1017 = vmatpush1.bf16.msra.mxu0 %v988
        %1018 = vmatprep.subr.bf16.mxu0 0
        %1019 = vmatpush1.bf16.msra.mxu0 %v989
        %1020 = vmatprep.subr.bf16.mxu0 0
        %1021 = vmatpush1.bf16.msra.mxu0 %v990
        %1022 = vmatprep.subr.bf16.mxu0 0
        %1023 = vmatpush1.bf16.msra.mxu0 %v991
        %1024 = vmatprep.subr.bf16.mxu0 0
        %1025 = vmatpush1.bf16.msra.mxu0 %v992
        %1026 = vmatprep.subr.bf16.mxu0 0
        %1027 = vmatpush1.bf16.msra.mxu0 0
        %1028 = vmatprep.subr.bf16.mxu0 0
        %1029 = vmatpush1.bf16.msra.mxu0 0
        %1030 = vmatprep.subr.bf16.mxu0 0
        %1031 = vmatpush1.bf16.msra.mxu0 0
        %1032 = vmatprep.subr.bf16.mxu0 0
        %1033 = vmatpush1.bf16.msra.mxu0 0
        %1034 = vmatprep.subr.bf16.mxu0 0
        %1035 = vmatpush1.bf16.msra.mxu0 0
        %1036 = vmatprep.subr.bf16.mxu0 0
        %1037 = vmatpush1.bf16.msra.mxu0 0
        %1038 = vmatprep.subr.bf16.mxu0 0
        %1039 = vmatpush1.bf16.msra.mxu0 0
        %1040 = vmatprep.subr.bf16.mxu0 0
        %1041 = vmatpush1.bf16.msra.mxu0 0
        %1042 = vmatprep.subr.bf16.mxu0 0
        %1043 = vmatpush1.bf16.msra.mxu0 0
        %1044 = vmatprep.subr.bf16.mxu0 0
        %1045 = vmatpush1.bf16.msra.mxu0 0
        %1046 = vmatprep.mubr.bf16.mxu0 0
        %1047 = vmatmul.mubr.bf16.gmra.mrb[0].mxu0 %v1012
        %v1048 = vpop.f32.mrb[0].mxu0
        %v1049 = vadd.f32 %v998, %v1048
        %v1050 = vpop.f32.mrb[0].mxu0
        %v1051 = vpop.f32.mrb[0].mxu0
        %v1052 = vadd.f32 %v1003, %v1051
        %v1053 = vpop.f32.mrb[0].mxu0
        %1054 = vdwg.mxu0
        %v1055 = vadd.f32 %v1049, %v278
        %v1056 = vadd.f32 %v1052, %v279
        %1057 = vst [vmem:[%s271] sm:$0xff] %v1055
        %1058 = vst [vmem:[%s271 + $0x8] sm:$0xff] %v1056
        %s1059 = sand.u32 %s181, 1
        %s1060 = scalar_lea.sflag [#allocation3], %s1059
        %s1061 = sand.u32 %s181, 1
        %s1062 = smul.addr %s1061, 16
        %s1063 = scalar_lea.vmem [#allocation2], %s1062
        // Predicated region
        $region49: #{bottleneck_forward.1} parent=47 // pred_check
          %p1064 = pneg %p191
        $region50: #{bottleneck_forward.1} parent=47 // pred_check_branch
          %1066 = sbr.rel (%p1064) target = $region52
        $region51: #{bottleneck_forward.1} parent=47 // pred_region
          %s1068 = ssub.s32 256, 256
          %1069 = vsyncadd %s1060, %s1068
          %s1070 = smul.addr %s21, 2
          %s1071 = smul.addr %s1070, 128
          %s1072 = scalar_lea.hbm %s7, %s1071
          %s1073 = sshll.u32 %s1063, 4
          %s1074 = int_to_ptr.vmem [resolvable:$true] %s1073
          %1079 = dma.vmem_to_hbm [thread:$0]  %s1074, 256, %s1072, %s1060, 128, 128, 8
        $region52: #{bottleneck_forward.1} parent=47 // pred_fallthru
          _
      $region48: #{bottleneck_forward.1} parent=5 // pred_fallthru
        _
      %p1080 = scmp.le.s32.totalorder 2, %s16
      // Predicated region
      $region53: #{bottleneck_forward.1} parent=5 // pred_check
        %p1081 = pneg %p1080
      $region54: #{bottleneck_forward.1} parent=5 // pred_check_branch
        %1083 = sbr.rel (%p1081) target = $region56
      $region55: #{bottleneck_forward.1} parent=5 // pred_region
        %s1084 = ssub.s32 %s16, 2
        // Predicated region
        $region57: #{bottleneck_forward.1} parent=55 // pred_check
          %p1085 = pneg %p197
        $region58: #{bottleneck_forward.1} parent=55 // pred_check_branch
          %1087 = sbr.rel (%p1085) target = $region60
        $region59: #{bottleneck_forward.1} parent=55 // pred_region
          %s1088 = sand.u32 %s182, 1
          %s1089 = scalar_lea.sflag [#allocation3], %s1088
          %s1090 = sand.u32 %s182, 1
          %s1091 = smul.addr %s1090, 16
          %s1092 = scalar_lea.vmem [#allocation2], %s1091
          %1093 = dma.done %s1089, 256
        $region60: #{bottleneck_forward.1} parent=55 // pred_fallthru
          _
      $region56: #{bottleneck_forward.1} parent=5 // pred_fallthru
        _
    $region6: #{bottleneck_forward.1} parent=1 // loop_footer
      %s20 = sadd.s32 1, %s16
    $region7: #{bottleneck_forward.1} parent=1 // loop_footer_branch
      %15 = sbr.rel target = $region3
    $region8: #{bottleneck_forward.1} parent=1 // loop_exit
      _
    %1094 = vsyncpa [#allocation3], 1
    %s1095 = scalar_lea.sflag [#allocation3], 1
    %1096 = vsyncpa %s1095, 1

</llo_original>
